<compile_context>
chip_gen: v7x
topology: tpu7x:2x2x1
jax: 0.10.0
libtpu: 0.0.40
codegen_flags: <defaults>
</compile_context>

<pallas_src>
import functools
import math

import jax
import jax.numpy as jnp
from jax import lax
from jax.experimental import pallas as pl
from jax.experimental.pallas import tpu as pltpu


def _tri_conv3x3_kernel(w_ref, x_ref, o_ref, *, H, W, C):
    # w_ref : VMEM f32 (R, 9*CO)  per-row weight columns; column j=(kh*3+kw)*CO+co
    #         holds w[t, co, c, kh, kw] for row r=(c, t, n) (independent of n).
    # x_ref : VMEM     (R, HW)    packed input slab, rows ordered (c, t, n).
    # o_ref : VMEM     (CO, T*N, HW) packed output, rows ordered (t, n).
    KH = KW = 3
    HW = H * W
    R = x_ref.shape[0]
    CO = o_ref.shape[0]
    TN = o_ref.shape[1]          # = 3 * N;  R = C * TN

    x2 = x_ref[...].astype(jnp.float32)          # (R, HW)
    w_all = w_ref[...].astype(jnp.float32)       # (R, 9*CO)

    # Boundary-validity masks (lane-wise, shared by every sublane row).
    pos = lax.broadcasted_iota(jnp.int32, (1, HW), 1)
    if (W & (W - 1)) == 0:                       # strength-reduce for pow2 W
        row_i = pos >> (W.bit_length() - 1)
        col_i = pos & (W - 1)
    else:
        row_i = pos // W
        col_i = pos % W
    m_top, m_bot = row_i >= 1, row_i <= H - 2
    m_lft, m_rgt = col_i >= 1, col_i <= W - 2

    # 9 taps x CO slab FMAs with per-row weight-column broadcasts.
    accs = [jnp.zeros((R, HW), jnp.float32) for _ in range(CO)]
    for kh in range(KH):
        for kw in range(KW):
            dh, dw = kh - 1, kw - 1
            off = dh * W + dw
            tap = x2 if off == 0 else pltpu.roll(x2, shift=(-off) % HW, axis=1)
            conds = []
            if dh == -1:
                conds.append(m_top)
            if dh == 1:
                conds.append(m_bot)
            if dw == -1:
                conds.append(m_lft)
            if dw == 1:
                conds.append(m_rgt)
            if conds:
                m = conds[0]
                for cnd in conds[1:]:
                    m = jnp.logical_and(m, cnd)
                tap = jnp.where(m, tap, 0.0)
            k = kh * KW + kw
            for co in range(CO):
                j = k * CO + co
                wc = w_all[:, j:j + 1]            # (R, 1) -> lane-broadcast
                accs[co] = accs[co] + wc * tap    # full-slab FMA on the VPU

    # Channel reduce: c is the outermost row index, so the reduce is C-1 adds of
    # contiguous sublane blocks; result rows are ordered (t, n).
    for co in range(CO):
        red = accs[co][0:TN, :]
        for ci in range(1, C):
            red = red + accs[co][ci * TN:(ci + 1) * TN, :]
        o_ref[co] = red.astype(o_ref.dtype)       # clean lane-dense slab store


def tri_recon_pallas(v, w, x, wv, ww, wx):
    """Forward of triRecon: returns (conv_v(v), conv_w(w), conv_x(x)), each NCHW."""
    N, C, H, W = v.shape
    CO = wv.shape[0]             # = 3
    T = 3                        # three independent convs / tensors
    HW = H * W
    TN = T * N
    R = C * TN
    K2 = 9

    # Pack inputs: one (R, HW) slab, rows ordered (c, t, n).
    x_stack = jnp.stack([v, w, x], axis=0)                     # (T, N, C, H, W)
    x_all = jnp.transpose(x_stack, (2, 0, 1, 3, 4)).reshape(R, HW)

    # Per-row weight columns: w_cols[r=(c,t,n), (kh*3+kw)*CO+co] = w[t, co, c, kh, kw].
    w_stack = jnp.stack([wv, ww, wx], axis=0)                  # (T, CO, C, 3, 3)
    cols = jnp.transpose(w_stack, (2, 0, 3, 4, 1))             # (C, T, KH, KW, CO)
    cols = cols.reshape(C, T, 1, K2 * CO)
    w_cols = jnp.broadcast_to(cols, (C, T, N, K2 * CO)).reshape(R, K2 * CO)

    kernel = functools.partial(_tri_conv3x3_kernel, H=H, W=W, C=C)

    out = pl.pallas_call(
        kernel,
        out_shape=jax.ShapeDtypeStruct((CO, TN, HW), v.dtype),
        grid_spec=pltpu.PrefetchScalarGridSpec(
            num_scalar_prefetch=0,
            grid=(1,),                                   # single step: whole problem
            in_specs=[
                pl.BlockSpec((R, K2 * CO), lambda i: (0, 0)),   # weight columns
                pl.BlockSpec((R, HW), lambda i: (0, 0)),        # packed inputs
            ],
            out_specs=pl.BlockSpec((CO, TN, HW), lambda i: (0, 0, 0)),
        ),
        compiler_params=pltpu.CompilerParams(
            dimension_semantics=("arbitrary",),
        ),
    )(w_cols, x_all)

    # Unpack: (CO, T, N, H, W) -> three NCHW tensors (tiny post-fusion).
    out = out.reshape(CO, T, N, H, W)
    ov = jnp.transpose(out[:, 0], (1, 0, 2, 3))
    ow = jnp.transpose(out[:, 1], (1, 0, 2, 3))
    ox = jnp.transpose(out[:, 2], (1, 0, 2, 3))
    return ov, ow, ox


def _ref_conv(x_nchw, w_oihw):
    return lax.conv_general_dilated(
        x_nchw, w_oihw, window_strides=(1, 1), padding="SAME",
        dimension_numbers=("NCHW", "OIHW", "NCHW"))


if __name__ == "__main__":
    # Small shapes consistent with the module: batch=2, chals=4, spatial=16.
    N, C, H, W = 2, 4, 16, 16
    CO, K = 3, 3

    key = jax.random.PRNGKey(0)
    kv, kw, kx, kwv, kww, kwx = jax.random.split(key, 6)

    v = jax.random.normal(kv, (N, C, H, W), dtype=jnp.float32)
    w = jax.random.normal(kw, (N, C, H, W), dtype=jnp.float32)
    x = jax.random.normal(kx, (N, C, H, W), dtype=jnp.float32)

    # Deterministic parameter init (PyTorch Conv2d weight shape: (out, in, kh, kw)).
    fan_in = C * K * K
    bound = 1.0 / math.sqrt(fan_in)
    wv = jax.random.uniform(kwv, (CO, C, K, K), jnp.float32, -bound, bound)
    ww = jax.random.uniform(kww, (CO, C, K, K), jnp.float32, -bound, bound)
    wx = jax.random.uniform(kwx, (CO, C, K, K), jnp.float32, -bound, bound)

    ov, ow, ox = jax.block_until_ready(
        jax.jit(tri_recon_pallas)(v, w, x, wv, ww, wx))

    # Correctness check against XLA's conv.
    rv, rw, rx = _ref_conv(v, wv), _ref_conv(w, ww), _ref_conv(x, wx)
    for got, ref in ((ov, rv), (ow, rw), (ox, rx)):
        assert got.shape == ref.shape
        assert jnp.allclose(got, ref, atol=1e-4, rtol=1e-4), \
            float(jnp.max(jnp.abs(got - ref)))

    print("KERNEL_OK")
</pallas_src>

<mosaic_0001>
module attributes {stable_mosaic.version = 11 : i64} {
  func.func @_tri_conv3x3_kernel(%arg0: i32, %arg1: memref<24x27xf32, #tpu.memory_space<vmem>>, %arg2: memref<24x256xf32, #tpu.memory_space<vmem>>, %arg3: memref<3x6x256xf32, #tpu.memory_space<vmem>>) attributes {dimension_semantics = [#tpu.dimension_semantics<arbitrary>], iteration_bounds = array<i64: 1>, scalar_prefetch = 0 : i64, scratch_operands = 0 : i64, tpu.core_type = #tpu.core_type<tc>, window_params = [{pipeline_mode = #tpu.pipeline_mode<synchronous>, transform_indices = @transform_0, window_bounds = array<i64: 24, 27>}, {pipeline_mode = #tpu.pipeline_mode<synchronous>, transform_indices = @transform_1, window_bounds = array<i64: 24, 256>}, {pipeline_mode = #tpu.pipeline_mode<synchronous>, transform_indices = @transform_2, window_bounds = array<i64: 3, 6, 256>}]} {
    %c0 = arith.constant 0 : index
    %c0_0 = arith.constant 0 : index
    %0 = vector.load %arg2[%c0, %c0_0] : memref<24x256xf32, #tpu.memory_space<vmem>>, vector<24x256xf32>
    %c0_1 = arith.constant 0 : index
    %c0_2 = arith.constant 0 : index
    %1 = vector.load %arg1[%c0_1, %c0_2] : memref<24x27xf32, #tpu.memory_space<vmem>>, vector<24x27xf32>
    %2 = tpu.iota {dimensions = array<i32: 1>} : vector<1x256xi32>
    %c4_i32 = arith.constant 4 : i32
    %3 = vector.broadcast %c4_i32 : i32 to vector<1x256xi32>
    %4 = arith.shrsi %2, %3 : vector<1x256xi32>
    %c15_i32 = arith.constant 15 : i32
    %5 = vector.broadcast %c15_i32 : i32 to vector<1x256xi32>
    %6 = arith.andi %2, %5 : vector<1x256xi32>
    %c1_i32 = arith.constant 1 : i32
    %7 = vector.broadcast %c1_i32 : i32 to vector<1x256xi32>
    %8 = arith.cmpi sge, %4, %7 : vector<1x256xi32>
    %c14_i32 = arith.constant 14 : i32
    %9 = vector.broadcast %c14_i32 : i32 to vector<1x256xi32>
    %10 = arith.cmpi sle, %4, %9 : vector<1x256xi32>
    %c1_i32_3 = arith.constant 1 : i32
    %11 = vector.broadcast %c1_i32_3 : i32 to vector<1x256xi32>
    %12 = arith.cmpi sge, %6, %11 : vector<1x256xi32>
    %c14_i32_4 = arith.constant 14 : i32
    %13 = vector.broadcast %c14_i32_4 : i32 to vector<1x256xi32>
    %14 = arith.cmpi sle, %6, %13 : vector<1x256xi32>
    %cst = arith.constant 0.000000e+00 : f32
    %15 = vector.broadcast %cst : f32 to vector<24x256xf32>
    %cst_5 = arith.constant 0.000000e+00 : f32
    %16 = vector.broadcast %cst_5 : f32 to vector<24x256xf32>
    %cst_6 = arith.constant 0.000000e+00 : f32
    %17 = vector.broadcast %cst_6 : f32 to vector<24x256xf32>
    %c17_i32 = arith.constant 17 : i32
    %18 = tpu.dynamic_rotate %0 by %c17_i32 dim 1 : vector<24x256xf32>, i32 -> vector<24x256xf32>
    %19 = arith.andi %8, %12 : vector<1x256xi1>
    %cst_7 = arith.constant 0.000000e+00 : f32
    %20 = vector.shape_cast %19 : vector<1x256xi1> to vector<1x256xi1>
    %21 = vector.broadcast %20 : vector<1x256xi1> to vector<24x256xi1>
    %22 = vector.broadcast %cst_7 : f32 to vector<24x256xf32>
    %23 = arith.select %21, %18, %22 : vector<24x256xi1>, vector<24x256xf32>
    %24 = vector.extract_strided_slice %1 {offsets = [0, 0], sizes = [24, 1], strides = [1, 1]} : vector<24x27xf32> to vector<24x1xf32>
    %25 = vector.broadcast %24 : vector<24x1xf32> to vector<24x256xf32>
    %26 = arith.mulf %25, %23 : vector<24x256xf32>
    %27 = arith.addf %15, %26 : vector<24x256xf32>
    %28 = vector.extract_strided_slice %1 {offsets = [0, 1], sizes = [24, 1], strides = [1, 1]} : vector<24x27xf32> to vector<24x1xf32>
    %29 = vector.broadcast %28 : vector<24x1xf32> to vector<24x256xf32>
    %30 = arith.mulf %29, %23 : vector<24x256xf32>
    %31 = arith.addf %16, %30 : vector<24x256xf32>
    %32 = vector.extract_strided_slice %1 {offsets = [0, 2], sizes = [24, 1], strides = [1, 1]} : vector<24x27xf32> to vector<24x1xf32>
    %33 = vector.broadcast %32 : vector<24x1xf32> to vector<24x256xf32>
    %34 = arith.mulf %33, %23 : vector<24x256xf32>
    %35 = arith.addf %17, %34 : vector<24x256xf32>
    %c16_i32 = arith.constant 16 : i32
    %36 = tpu.dynamic_rotate %0 by %c16_i32 dim 1 : vector<24x256xf32>, i32 -> vector<24x256xf32>
    %cst_8 = arith.constant 0.000000e+00 : f32
    %37 = vector.shape_cast %8 : vector<1x256xi1> to vector<1x256xi1>
    %38 = vector.broadcast %37 : vector<1x256xi1> to vector<24x256xi1>
    %39 = vector.broadcast %cst_8 : f32 to vector<24x256xf32>
    %40 = arith.select %38, %36, %39 : vector<24x256xi1>, vector<24x256xf32>
    %41 = vector.extract_strided_slice %1 {offsets = [0, 3], sizes = [24, 1], strides = [1, 1]} : vector<24x27xf32> to vector<24x1xf32>
    %42 = vector.broadcast %41 : vector<24x1xf32> to vector<24x256xf32>
    %43 = arith.mulf %42, %40 : vector<24x256xf32>
    %44 = arith.addf %27, %43 : vector<24x256xf32>
    %45 = vector.extract_strided_slice %1 {offsets = [0, 4], sizes = [24, 1], strides = [1, 1]} : vector<24x27xf32> to vector<24x1xf32>
    %46 = vector.broadcast %45 : vector<24x1xf32> to vector<24x256xf32>
    %47 = arith.mulf %46, %40 : vector<24x256xf32>
    %48 = arith.addf %31, %47 : vector<24x256xf32>
    %49 = vector.extract_strided_slice %1 {offsets = [0, 5], sizes = [24, 1], strides = [1, 1]} : vector<24x27xf32> to vector<24x1xf32>
    %50 = vector.broadcast %49 : vector<24x1xf32> to vector<24x256xf32>
    %51 = arith.mulf %50, %40 : vector<24x256xf32>
    %52 = arith.addf %35, %51 : vector<24x256xf32>
    %c15_i32_9 = arith.constant 15 : i32
    %53 = tpu.dynamic_rotate %0 by %c15_i32_9 dim 1 : vector<24x256xf32>, i32 -> vector<24x256xf32>
    %54 = arith.andi %8, %14 : vector<1x256xi1>
    %cst_10 = arith.constant 0.000000e+00 : f32
    %55 = vector.shape_cast %54 : vector<1x256xi1> to vector<1x256xi1>
    %56 = vector.broadcast %55 : vector<1x256xi1> to vector<24x256xi1>
    %57 = vector.broadcast %cst_10 : f32 to vector<24x256xf32>
    %58 = arith.select %56, %53, %57 : vector<24x256xi1>, vector<24x256xf32>
    %59 = vector.extract_strided_slice %1 {offsets = [0, 6], sizes = [24, 1], strides = [1, 1]} : vector<24x27xf32> to vector<24x1xf32>
    %60 = vector.broadcast %59 : vector<24x1xf32> to vector<24x256xf32>
    %61 = arith.mulf %60, %58 : vector<24x256xf32>
    %62 = arith.addf %44, %61 : vector<24x256xf32>
    %63 = vector.extract_strided_slice %1 {offsets = [0, 7], sizes = [24, 1], strides = [1, 1]} : vector<24x27xf32> to vector<24x1xf32>
    %64 = vector.broadcast %63 : vector<24x1xf32> to vector<24x256xf32>
    %65 = arith.mulf %64, %58 : vector<24x256xf32>
    %66 = arith.addf %48, %65 : vector<24x256xf32>
    %67 = vector.extract_strided_slice %1 {offsets = [0, 8], sizes = [24, 1], strides = [1, 1]} : vector<24x27xf32> to vector<24x1xf32>
    %68 = vector.broadcast %67 : vector<24x1xf32> to vector<24x256xf32>
    %69 = arith.mulf %68, %58 : vector<24x256xf32>
    %70 = arith.addf %52, %69 : vector<24x256xf32>
    %c1_i32_11 = arith.constant 1 : i32
    %71 = tpu.dynamic_rotate %0 by %c1_i32_11 dim 1 : vector<24x256xf32>, i32 -> vector<24x256xf32>
    %cst_12 = arith.constant 0.000000e+00 : f32
    %72 = vector.shape_cast %12 : vector<1x256xi1> to vector<1x256xi1>
    %73 = vector.broadcast %72 : vector<1x256xi1> to vector<24x256xi1>
    %74 = vector.broadcast %cst_12 : f32 to vector<24x256xf32>
    %75 = arith.select %73, %71, %74 : vector<24x256xi1>, vector<24x256xf32>
    %76 = vector.extract_strided_slice %1 {offsets = [0, 9], sizes = [24, 1], strides = [1, 1]} : vector<24x27xf32> to vector<24x1xf32>
    %77 = vector.broadcast %76 : vector<24x1xf32> to vector<24x256xf32>
    %78 = arith.mulf %77, %75 : vector<24x256xf32>
    %79 = arith.addf %62, %78 : vector<24x256xf32>
    %80 = vector.extract_strided_slice %1 {offsets = [0, 10], sizes = [24, 1], strides = [1, 1]} : vector<24x27xf32> to vector<24x1xf32>
    %81 = vector.broadcast %80 : vector<24x1xf32> to vector<24x256xf32>
    %82 = arith.mulf %81, %75 : vector<24x256xf32>
    %83 = arith.addf %66, %82 : vector<24x256xf32>
    %84 = vector.extract_strided_slice %1 {offsets = [0, 11], sizes = [24, 1], strides = [1, 1]} : vector<24x27xf32> to vector<24x1xf32>
    %85 = vector.broadcast %84 : vector<24x1xf32> to vector<24x256xf32>
    %86 = arith.mulf %85, %75 : vector<24x256xf32>
    %87 = arith.addf %70, %86 : vector<24x256xf32>
    %88 = vector.extract_strided_slice %1 {offsets = [0, 12], sizes = [24, 1], strides = [1, 1]} : vector<24x27xf32> to vector<24x1xf32>
    %89 = vector.broadcast %88 : vector<24x1xf32> to vector<24x256xf32>
    %90 = arith.mulf %89, %0 : vector<24x256xf32>
    %91 = arith.addf %79, %90 : vector<24x256xf32>
    %92 = vector.extract_strided_slice %1 {offsets = [0, 13], sizes = [24, 1], strides = [1, 1]} : vector<24x27xf32> to vector<24x1xf32>
    %93 = vector.broadcast %92 : vector<24x1xf32> to vector<24x256xf32>
    %94 = arith.mulf %93, %0 : vector<24x256xf32>
    %95 = arith.addf %83, %94 : vector<24x256xf32>
    %96 = vector.extract_strided_slice %1 {offsets = [0, 14], sizes = [24, 1], strides = [1, 1]} : vector<24x27xf32> to vector<24x1xf32>
    %97 = vector.broadcast %96 : vector<24x1xf32> to vector<24x256xf32>
    %98 = arith.mulf %97, %0 : vector<24x256xf32>
    %99 = arith.addf %87, %98 : vector<24x256xf32>
    %c255_i32 = arith.constant 255 : i32
    %100 = tpu.dynamic_rotate %0 by %c255_i32 dim 1 : vector<24x256xf32>, i32 -> vector<24x256xf32>
    %cst_13 = arith.constant 0.000000e+00 : f32
    %101 = vector.shape_cast %14 : vector<1x256xi1> to vector<1x256xi1>
    %102 = vector.broadcast %101 : vector<1x256xi1> to vector<24x256xi1>
    %103 = vector.broadcast %cst_13 : f32 to vector<24x256xf32>
    %104 = arith.select %102, %100, %103 : vector<24x256xi1>, vector<24x256xf32>
    %105 = vector.extract_strided_slice %1 {offsets = [0, 15], sizes = [24, 1], strides = [1, 1]} : vector<24x27xf32> to vector<24x1xf32>
    %106 = vector.broadcast %105 : vector<24x1xf32> to vector<24x256xf32>
    %107 = arith.mulf %106, %104 : vector<24x256xf32>
    %108 = arith.addf %91, %107 : vector<24x256xf32>
    %109 = vector.extract_strided_slice %1 {offsets = [0, 16], sizes = [24, 1], strides = [1, 1]} : vector<24x27xf32> to vector<24x1xf32>
    %110 = vector.broadcast %109 : vector<24x1xf32> to vector<24x256xf32>
    %111 = arith.mulf %110, %104 : vector<24x256xf32>
    %112 = arith.addf %95, %111 : vector<24x256xf32>
    %113 = vector.extract_strided_slice %1 {offsets = [0, 17], sizes = [24, 1], strides = [1, 1]} : vector<24x27xf32> to vector<24x1xf32>
    %114 = vector.broadcast %113 : vector<24x1xf32> to vector<24x256xf32>
    %115 = arith.mulf %114, %104 : vector<24x256xf32>
    %116 = arith.addf %99, %115 : vector<24x256xf32>
    %c241_i32 = arith.constant 241 : i32
    %117 = tpu.dynamic_rotate %0 by %c241_i32 dim 1 : vector<24x256xf32>, i32 -> vector<24x256xf32>
    %118 = arith.andi %10, %12 : vector<1x256xi1>
    %cst_14 = arith.constant 0.000000e+00 : f32
    %119 = vector.shape_cast %118 : vector<1x256xi1> to vector<1x256xi1>
    %120 = vector.broadcast %119 : vector<1x256xi1> to vector<24x256xi1>
    %121 = vector.broadcast %cst_14 : f32 to vector<24x256xf32>
    %122 = arith.select %120, %117, %121 : vector<24x256xi1>, vector<24x256xf32>
    %123 = vector.extract_strided_slice %1 {offsets = [0, 18], sizes = [24, 1], strides = [1, 1]} : vector<24x27xf32> to vector<24x1xf32>
    %124 = vector.broadcast %123 : vector<24x1xf32> to vector<24x256xf32>
    %125 = arith.mulf %124, %122 : vector<24x256xf32>
    %126 = arith.addf %108, %125 : vector<24x256xf32>
    %127 = vector.extract_strided_slice %1 {offsets = [0, 19], sizes = [24, 1], strides = [1, 1]} : vector<24x27xf32> to vector<24x1xf32>
    %128 = vector.broadcast %127 : vector<24x1xf32> to vector<24x256xf32>
    %129 = arith.mulf %128, %122 : vector<24x256xf32>
    %130 = arith.addf %112, %129 : vector<24x256xf32>
    %131 = vector.extract_strided_slice %1 {offsets = [0, 20], sizes = [24, 1], strides = [1, 1]} : vector<24x27xf32> to vector<24x1xf32>
    %132 = vector.broadcast %131 : vector<24x1xf32> to vector<24x256xf32>
    %133 = arith.mulf %132, %122 : vector<24x256xf32>
    %134 = arith.addf %116, %133 : vector<24x256xf32>
    %c240_i32 = arith.constant 240 : i32
    %135 = tpu.dynamic_rotate %0 by %c240_i32 dim 1 : vector<24x256xf32>, i32 -> vector<24x256xf32>
    %cst_15 = arith.constant 0.000000e+00 : f32
    %136 = vector.shape_cast %10 : vector<1x256xi1> to vector<1x256xi1>
    %137 = vector.broadcast %136 : vector<1x256xi1> to vector<24x256xi1>
    %138 = vector.broadcast %cst_15 : f32 to vector<24x256xf32>
    %139 = arith.select %137, %135, %138 : vector<24x256xi1>, vector<24x256xf32>
    %140 = vector.extract_strided_slice %1 {offsets = [0, 21], sizes = [24, 1], strides = [1, 1]} : vector<24x27xf32> to vector<24x1xf32>
    %141 = vector.broadcast %140 : vector<24x1xf32> to vector<24x256xf32>
    %142 = arith.mulf %141, %139 : vector<24x256xf32>
    %143 = arith.addf %126, %142 : vector<24x256xf32>
    %144 = vector.extract_strided_slice %1 {offsets = [0, 22], sizes = [24, 1], strides = [1, 1]} : vector<24x27xf32> to vector<24x1xf32>
    %145 = vector.broadcast %144 : vector<24x1xf32> to vector<24x256xf32>
    %146 = arith.mulf %145, %139 : vector<24x256xf32>
    %147 = arith.addf %130, %146 : vector<24x256xf32>
    %148 = vector.extract_strided_slice %1 {offsets = [0, 23], sizes = [24, 1], strides = [1, 1]} : vector<24x27xf32> to vector<24x1xf32>
    %149 = vector.broadcast %148 : vector<24x1xf32> to vector<24x256xf32>
    %150 = arith.mulf %149, %139 : vector<24x256xf32>
    %151 = arith.addf %134, %150 : vector<24x256xf32>
    %c239_i32 = arith.constant 239 : i32
    %152 = tpu.dynamic_rotate %0 by %c239_i32 dim 1 : vector<24x256xf32>, i32 -> vector<24x256xf32>
    %153 = arith.andi %10, %14 : vector<1x256xi1>
    %cst_16 = arith.constant 0.000000e+00 : f32
    %154 = vector.shape_cast %153 : vector<1x256xi1> to vector<1x256xi1>
    %155 = vector.broadcast %154 : vector<1x256xi1> to vector<24x256xi1>
    %156 = vector.broadcast %cst_16 : f32 to vector<24x256xf32>
    %157 = arith.select %155, %152, %156 : vector<24x256xi1>, vector<24x256xf32>
    %158 = vector.extract_strided_slice %1 {offsets = [0, 24], sizes = [24, 1], strides = [1, 1]} : vector<24x27xf32> to vector<24x1xf32>
    %159 = vector.broadcast %158 : vector<24x1xf32> to vector<24x256xf32>
    %160 = arith.mulf %159, %157 : vector<24x256xf32>
    %161 = arith.addf %143, %160 : vector<24x256xf32>
    %162 = vector.extract_strided_slice %1 {offsets = [0, 25], sizes = [24, 1], strides = [1, 1]} : vector<24x27xf32> to vector<24x1xf32>
    %163 = vector.broadcast %162 : vector<24x1xf32> to vector<24x256xf32>
    %164 = arith.mulf %163, %157 : vector<24x256xf32>
    %165 = arith.addf %147, %164 : vector<24x256xf32>
    %166 = vector.extract_strided_slice %1 {offsets = [0, 26], sizes = [24, 1], strides = [1, 1]} : vector<24x27xf32> to vector<24x1xf32>
    %167 = vector.broadcast %166 : vector<24x1xf32> to vector<24x256xf32>
    %168 = arith.mulf %167, %157 : vector<24x256xf32>
    %169 = arith.addf %151, %168 : vector<24x256xf32>
    %170 = vector.extract_strided_slice %161 {offsets = [0, 0], sizes = [6, 256], strides = [1, 1]} : vector<24x256xf32> to vector<6x256xf32>
    %171 = vector.extract_strided_slice %161 {offsets = [6, 0], sizes = [6, 256], strides = [1, 1]} : vector<24x256xf32> to vector<6x256xf32>
    %172 = arith.addf %170, %171 : vector<6x256xf32>
    %173 = vector.extract_strided_slice %161 {offsets = [12, 0], sizes = [6, 256], strides = [1, 1]} : vector<24x256xf32> to vector<6x256xf32>
    %174 = arith.addf %172, %173 : vector<6x256xf32>
    %175 = vector.extract_strided_slice %161 {offsets = [18, 0], sizes = [6, 256], strides = [1, 1]} : vector<24x256xf32> to vector<6x256xf32>
    %176 = arith.addf %174, %175 : vector<6x256xf32>
    %c0_17 = arith.constant 0 : index
    %c0_18 = arith.constant 0 : index
    %c0_19 = arith.constant 0 : index
    %177 = vector.load %arg3[%c0_17, %c0_18, %c0_19] : memref<3x6x256xf32, #tpu.memory_space<vmem>>, vector<1x6x256xf32>
    %178 = vector.shape_cast %177 : vector<1x6x256xf32> to vector<6x256xf32>
    %179 = vector.shape_cast %176 : vector<6x256xf32> to vector<1x6x256xf32>
    tpu.vector_store %arg3[%c0_17, %c0_18, %c0_19], %179 {strides = array<i32>} : memref<3x6x256xf32, #tpu.memory_space<vmem>>, vector<1x6x256xf32>,
    %180 = vector.extract_strided_slice %165 {offsets = [0, 0], sizes = [6, 256], strides = [1, 1]} : vector<24x256xf32> to vector<6x256xf32>
    %181 = vector.extract_strided_slice %165 {offsets = [6, 0], sizes = [6, 256], strides = [1, 1]} : vector<24x256xf32> to vector<6x256xf32>
    %182 = arith.addf %180, %181 : vector<6x256xf32>
    %183 = vector.extract_strided_slice %165 {offsets = [12, 0], sizes = [6, 256], strides = [1, 1]} : vector<24x256xf32> to vector<6x256xf32>
    %184 = arith.addf %182, %183 : vector<6x256xf32>
    %185 = vector.extract_strided_slice %165 {offsets = [18, 0], sizes = [6, 256], strides = [1, 1]} : vector<24x256xf32> to vector<6x256xf32>
    %186 = arith.addf %184, %185 : vector<6x256xf32>
    %c1 = arith.constant 1 : index
    %c0_20 = arith.constant 0 : index
    %c0_21 = arith.constant 0 : index
    %187 = vector.load %arg3[%c1, %c0_20, %c0_21] : memref<3x6x256xf32, #tpu.memory_space<vmem>>, vector<1x6x256xf32>
    %188 = vector.shape_cast %187 : vector<1x6x256xf32> to vector<6x256xf32>
    %189 = vector.shape_cast %186 : vector<6x256xf32> to vector<1x6x256xf32>
    tpu.vector_store %arg3[%c1, %c0_20, %c0_21], %189 {strides = array<i32>} : memref<3x6x256xf32, #tpu.memory_space<vmem>>, vector<1x6x256xf32>,
    %190 = vector.extract_strided_slice %169 {offsets = [0, 0], sizes = [6, 256], strides = [1, 1]} : vector<24x256xf32> to vector<6x256xf32>
    %191 = vector.extract_strided_slice %169 {offsets = [6, 0], sizes = [6, 256], strides = [1, 1]} : vector<24x256xf32> to vector<6x256xf32>
    %192 = arith.addf %190, %191 : vector<6x256xf32>
    %193 = vector.extract_strided_slice %169 {offsets = [12, 0], sizes = [6, 256], strides = [1, 1]} : vector<24x256xf32> to vector<6x256xf32>
    %194 = arith.addf %192, %193 : vector<6x256xf32>
    %195 = vector.extract_strided_slice %169 {offsets = [18, 0], sizes = [6, 256], strides = [1, 1]} : vector<24x256xf32> to vector<6x256xf32>
    %196 = arith.addf %194, %195 : vector<6x256xf32>
    %c2 = arith.constant 2 : index
    %c0_22 = arith.constant 0 : index
    %c0_23 = arith.constant 0 : index
    %197 = vector.load %arg3[%c2, %c0_22, %c0_23] : memref<3x6x256xf32, #tpu.memory_space<vmem>>, vector<1x6x256xf32>
    %198 = vector.shape_cast %197 : vector<1x6x256xf32> to vector<6x256xf32>
    %199 = vector.shape_cast %196 : vector<6x256xf32> to vector<1x6x256xf32>
    tpu.vector_store %arg3[%c2, %c0_22, %c0_23], %199 {strides = array<i32>} : memref<3x6x256xf32, #tpu.memory_space<vmem>>, vector<1x6x256xf32>,
    return
  }
  func.func @transform_0(%arg0: i32) -> (i32, i32) {
    %c0_i32 = arith.constant 0 : i32
    %c0_i32_0 = arith.constant 0 : i32
    %c0_i32_1 = arith.constant 0 : i32
    return %c0_i32, %c0_i32_0 : i32, i32
  }
  func.func @transform_1(%arg0: i32) -> (i32, i32) {
    %c0_i32 = arith.constant 0 : i32
    %c0_i32_0 = arith.constant 0 : i32
    %c0_i32_1 = arith.constant 0 : i32
    return %c0_i32, %c0_i32_0 : i32, i32
  }
  func.func @transform_2(%arg0: i32) -> (i32, i32, i32) {
    %c0_i32 = arith.constant 0 : i32
    %c0_i32_0 = arith.constant 0 : i32
    %c0_i32_1 = arith.constant 0 : i32
    %c0_i32_2 = arith.constant 0 : i32
    return %c0_i32, %c0_i32_0, %c0_i32_1 : i32, i32, i32
  }
}

</mosaic_0001>

<llo_original>
// kernel: tri_recon_pallas.1
$region0: #{tri_recon_pallas.1}
  #allocation0 [shape = 'u32[]', space=smem, size = 0x4, offset = 0x4, fixed_abs, tag = 'smem constant byte address 0x4 - core index']
  #allocation1 [shape = 'u32[144,128]{1,0:T(1,128)}', space=vmem, size = 0x12000, scoped, tag = 'internal scratch']
  %s0 = inlined_call_operand.vmem [shape: f32[24,27], index: 0, kind: input, shape index: {}]
  %s1 = inlined_call_operand.vmem [shape: f32[24,256], index: 1, kind: input, shape index: {}]
  %s2 = inlined_call_operand.vmem [shape: f32[3,6,256], index: 2, kind: output, shape index: {}]
  %s3 = sld [smem:[#allocation0]]
  $region18: #{tri_recon_pallas.1} parent=0
    _
  %s5 = ssub.s32 1, %s3
  %s6 = scalar_select 0, %s5, %s3
  // Predicated region
  $region2: #{tri_recon_pallas.1} parent=0 // pred_check
    _
  $region3: #{tri_recon_pallas.1} parent=0 // pred_check_branch
    %8 = sbr.rel (0) target = $region5
  $region4: #{tri_recon_pallas.1} parent=0 // pred_region
    _
  $region5: #{tri_recon_pallas.1} parent=0 // pred_fallthru
    _
  // Predicated region
  $region6: #{tri_recon_pallas.1} parent=0 // pred_check
    _
  $region7: #{tri_recon_pallas.1} parent=0 // pred_check_branch
    %10 = sbr.rel (0) target = $region9
  $region8: #{tri_recon_pallas.1} parent=0 // pred_region
    _
  $region9: #{tri_recon_pallas.1} parent=0 // pred_fallthru
    _
  %v11 = vld [vmem:[%s1] sm:$0xff]
  %v12 = vld [vmem:[%s1 + $0x8] sm:$0xff]
  %v13 = vld [vmem:[%s1 + $0x10] sm:$0xff]
  %v14 = vld [vmem:[%s1 + $0x18] sm:$0xff]
  %v15 = vld [vmem:[%s1 + $0x20] sm:$0xff]
  %v16 = vld [vmem:[%s1 + $0x28] sm:$0xff]
  %v17 = vld [vmem:[%s0] sm:$0xff]
  %v18 = vld [vmem:[%s0 + $0x8] sm:$0xff]
  %v19 = vld [vmem:[%s0 + $0x10] sm:$0xff]
  %v20 = vlaneseq
  %v21 = vand.u32 %v20, 127
  %v22 = vadd.s32 %v21, 128
  %v23 = vshra.s32 %v21, 4
  %v24 = vshra.s32 %v22, 4
  %v25 = vand.u32 %v21, 15
  %v26 = vand.u32 %v22, 15
  %vm27 = vcmp.ge.s32.totalorder %v23, 1
  %vm28 = vcmp.ge.s32.totalorder %v24, 1
  %vm29 = vcmp.le.s32.totalorder %v23, 14
  %vm30 = vcmp.le.s32.totalorder %v24, 14
  %vm31 = vcmp.ge.s32.totalorder %v25, 1
  %vm32 = vcmp.ge.s32.totalorder %v26, 1
  %vm33 = vcmp.le.s32.totalorder %v25, 14
  %vm34 = vcmp.le.s32.totalorder %v26, 14
  %35 = vrot.lane.b32.xlu0 %v11, 17
  %v36 = vpop.permute.xlu0 %35
  %37 = vrot.lane.b32.xlu0 %v13, 17
  %v38 = vpop.permute.xlu0 %37
  %39 = vrot.lane.b32.xlu0 %v15, 17
  %v40 = vpop.permute.xlu0 %39
  %41 = vrot.lane.b32.xlu0 %v12, 17
  %v42 = vpop.permute.xlu0 %41
  %43 = vrot.lane.b32.xlu0 %v14, 17
  %v44 = vpop.permute.xlu0 %43
  %45 = vrot.lane.b32.xlu0 %v16, 17
  %v46 = vpop.permute.xlu0 %45
  %vm47 = vcmp.lt.s32.totalorder %v21, 17
  %v48 = vsel %vm47, %v36, %v42
  %v49 = vsel %vm47, %v38, %v44
  %v50 = vsel %vm47, %v40, %v46
  %v51 = vsel %vm47, %v42, %v36
  %v52 = vsel %vm47, %v44, %v38
  %v53 = vsel %vm47, %v46, %v40
  %vm54 = vmand %vm27, %vm31
  %vm55 = vmand %vm28, %vm32
  %v56 = vsel %vm54, 1, 0
  %v57 = vsel %vm55, 1, 0
  %vm58 = vcmp.eq.s32.totalorder %v56, 1
  %vm59 = vcmp.eq.s32.totalorder %v57, 1
  %v60 = vsel %vm58, %v51, 0.0
  %v61 = vsel %vm59, %v48, 0.0
  %v62 = vsel %vm58, %v52, 0.0
  %v63 = vsel %vm59, %v49, 0.0
  %v64 = vsel %vm58, %v53, 0.0
  %v65 = vsel %vm59, %v50, 0.0
  %67 = vset.pattern.permute.xlu0 0
  %68 = vperm.xlu0 %67, %v17
  %v69 = vpop.permute.xlu0 %68
  %72 = vset.pattern.permute.xlu0 0
  %73 = vperm.xlu0 %72, %v18
  %v74 = vpop.permute.xlu0 %73
  %77 = vset.pattern.permute.xlu0 0
  %78 = vperm.xlu0 %77, %v19
  %v79 = vpop.permute.xlu0 %78
  %v81 = vmul.f32 %v69, %v60
  %v82 = vmul.f32 %v69, %v61
  %v83 = vmul.f32 %v74, %v62
  %v84 = vmul.f32 %v74, %v63
  %v85 = vmul.f32 %v79, %v64
  %v86 = vmul.f32 %v79, %v65
  %v87 = vadd.f32 %v81, 0.0
  %v88 = vadd.f32 %v82, 0.0
  %v89 = vadd.f32 %v83, 0.0
  %v90 = vadd.f32 %v84, 0.0
  %v91 = vadd.f32 %v85, 0.0
  %v92 = vadd.f32 %v86, 0.0
  %93 = vset.pattern.permute.xlu0 1
  %94 = vperm.xlu0 %93, %v17
  %v95 = vpop.permute.xlu0 %94
  %97 = vset.pattern.permute.xlu0 1
  %98 = vperm.xlu0 %97, %v18
  %v99 = vpop.permute.xlu0 %98
  %101 = vset.pattern.permute.xlu0 1
  %102 = vperm.xlu0 %101, %v19
  %v103 = vpop.permute.xlu0 %102
  %v105 = vmul.f32 %v95, %v60
  %v106 = vmul.f32 %v95, %v61
  %v107 = vmul.f32 %v99, %v62
  %v108 = vmul.f32 %v99, %v63
  %v109 = vmul.f32 %v103, %v64
  %v110 = vmul.f32 %v103, %v65
  %v111 = vadd.f32 %v105, 0.0
  %v112 = vadd.f32 %v106, 0.0
  %v113 = vadd.f32 %v107, 0.0
  %v114 = vadd.f32 %v108, 0.0
  %v115 = vadd.f32 %v109, 0.0
  %v116 = vadd.f32 %v110, 0.0
  %117 = vset.pattern.permute.xlu0 2
  %118 = vperm.xlu0 %117, %v17
  %v119 = vpop.permute.xlu0 %118
  %121 = vset.pattern.permute.xlu0 2
  %122 = vperm.xlu0 %121, %v18
  %v123 = vpop.permute.xlu0 %122
  %125 = vset.pattern.permute.xlu0 2
  %126 = vperm.xlu0 %125, %v19
  %v127 = vpop.permute.xlu0 %126
  %v129 = vmul.f32 %v119, %v60
  %v130 = vmul.f32 %v119, %v61
  %v131 = vmul.f32 %v123, %v62
  %v132 = vmul.f32 %v123, %v63
  %v133 = vmul.f32 %v127, %v64
  %v134 = vmul.f32 %v127, %v65
  %v135 = vadd.f32 %v129, 0.0
  %v136 = vadd.f32 %v130, 0.0
  %v137 = vadd.f32 %v131, 0.0
  %v138 = vadd.f32 %v132, 0.0
  %v139 = vadd.f32 %v133, 0.0
  %v140 = vadd.f32 %v134, 0.0
  %141 = vrot.lane.b32.xlu0 %v11, 16
  %v142 = vpop.permute.xlu0 %141
  %143 = vrot.lane.b32.xlu0 %v13, 16
  %v144 = vpop.permute.xlu0 %143
  %145 = vrot.lane.b32.xlu0 %v15, 16
  %v146 = vpop.permute.xlu0 %145
  %147 = vrot.lane.b32.xlu0 %v12, 16
  %v148 = vpop.permute.xlu0 %147
  %149 = vrot.lane.b32.xlu0 %v14, 16
  %v150 = vpop.permute.xlu0 %149
  %151 = vrot.lane.b32.xlu0 %v16, 16
  %v152 = vpop.permute.xlu0 %151
  %vm153 = vcmp.lt.s32.totalorder %v21, 16
  %v154 = vsel %vm153, %v142, %v148
  %v155 = vsel %vm153, %v144, %v150
  %v156 = vsel %vm153, %v146, %v152
  %v157 = vsel %vm153, %v148, %v142
  %v158 = vsel %vm153, %v150, %v144
  %v159 = vsel %vm153, %v152, %v146
  %v160 = vsel %vm27, 1, 0
  %v161 = vsel %vm28, 1, 0
  %vm162 = vcmp.eq.s32.totalorder %v160, 1
  %vm163 = vcmp.eq.s32.totalorder %v161, 1
  %v164 = vsel %vm162, %v157, 0.0
  %v165 = vsel %vm163, %v154, 0.0
  %v166 = vsel %vm162, %v158, 0.0
  %v167 = vsel %vm163, %v155, 0.0
  %v168 = vsel %vm162, %v159, 0.0
  %v169 = vsel %vm163, %v156, 0.0
  %170 = vset.pattern.permute.xlu0 3
  %171 = vperm.xlu0 %170, %v17
  %v172 = vpop.permute.xlu0 %171
  %174 = vset.pattern.permute.xlu0 3
  %175 = vperm.xlu0 %174, %v18
  %v176 = vpop.permute.xlu0 %175
  %178 = vset.pattern.permute.xlu0 3
  %179 = vperm.xlu0 %178, %v19
  %v180 = vpop.permute.xlu0 %179
  %v182 = vmul.f32 %v172, %v164
  %v183 = vmul.f32 %v172, %v165
  %v184 = vmul.f32 %v176, %v166
  %v185 = vmul.f32 %v176, %v167
  %v186 = vmul.f32 %v180, %v168
  %v187 = vmul.f32 %v180, %v169
  %v188 = vadd.f32 %v87, %v182
  %v189 = vadd.f32 %v88, %v183
  %v190 = vadd.f32 %v89, %v184
  %v191 = vadd.f32 %v90, %v185
  %v192 = vadd.f32 %v91, %v186
  %v193 = vadd.f32 %v92, %v187
  %194 = vset.pattern.permute.xlu0 4
  %195 = vperm.xlu0 %194, %v17
  %v196 = vpop.permute.xlu0 %195
  %198 = vset.pattern.permute.xlu0 4
  %199 = vperm.xlu0 %198, %v18
  %v200 = vpop.permute.xlu0 %199
  %202 = vset.pattern.permute.xlu0 4
  %203 = vperm.xlu0 %202, %v19
  %v204 = vpop.permute.xlu0 %203
  %v206 = vmul.f32 %v196, %v164
  %v207 = vmul.f32 %v196, %v165
  %v208 = vmul.f32 %v200, %v166
  %v209 = vmul.f32 %v200, %v167
  %v210 = vmul.f32 %v204, %v168
  %v211 = vmul.f32 %v204, %v169
  %v212 = vadd.f32 %v111, %v206
  %v213 = vadd.f32 %v112, %v207
  %v214 = vadd.f32 %v113, %v208
  %v215 = vadd.f32 %v114, %v209
  %v216 = vadd.f32 %v115, %v210
  %v217 = vadd.f32 %v116, %v211
  %218 = vset.pattern.permute.xlu0 5
  %219 = vperm.xlu0 %218, %v17
  %v220 = vpop.permute.xlu0 %219
  %222 = vset.pattern.permute.xlu0 5
  %223 = vperm.xlu0 %222, %v18
  %v224 = vpop.permute.xlu0 %223
  %226 = vset.pattern.permute.xlu0 5
  %227 = vperm.xlu0 %226, %v19
  %v228 = vpop.permute.xlu0 %227
  %v230 = vmul.f32 %v220, %v164
  %v231 = vmul.f32 %v220, %v165
  %v232 = vmul.f32 %v224, %v166
  %v233 = vmul.f32 %v224, %v167
  %v234 = vmul.f32 %v228, %v168
  %v235 = vmul.f32 %v228, %v169
  %v236 = vadd.f32 %v135, %v230
  %v237 = vadd.f32 %v136, %v231
  %v238 = vadd.f32 %v137, %v232
  %v239 = vadd.f32 %v138, %v233
  %v240 = vadd.f32 %v139, %v234
  %v241 = vadd.f32 %v140, %v235
  %242 = vrot.lane.b32.xlu0 %v11, 15
  %v243 = vpop.permute.xlu0 %242
  %244 = vrot.lane.b32.xlu0 %v13, 15
  %v245 = vpop.permute.xlu0 %244
  %246 = vrot.lane.b32.xlu0 %v15, 15
  %v247 = vpop.permute.xlu0 %246
  %248 = vrot.lane.b32.xlu0 %v12, 15
  %v249 = vpop.permute.xlu0 %248
  %250 = vrot.lane.b32.xlu0 %v14, 15
  %v251 = vpop.permute.xlu0 %250
  %252 = vrot.lane.b32.xlu0 %v16, 15
  %v253 = vpop.permute.xlu0 %252
  %vm254 = vcmp.lt.s32.totalorder %v21, 15
  %v255 = vsel %vm254, %v243, %v249
  %v256 = vsel %vm254, %v245, %v251
  %v257 = vsel %vm254, %v247, %v253
  %v258 = vsel %vm254, %v249, %v243
  %v259 = vsel %vm254, %v251, %v245
  %v260 = vsel %vm254, %v253, %v247
  %vm261 = vmand %vm27, %vm33
  %vm262 = vmand %vm28, %vm34
  %v263 = vsel %vm261, 1, 0
  %v264 = vsel %vm262, 1, 0
  %vm265 = vcmp.eq.s32.totalorder %v263, 1
  %vm266 = vcmp.eq.s32.totalorder %v264, 1
  %v267 = vsel %vm265, %v258, 0.0
  %v268 = vsel %vm266, %v255, 0.0
  %v269 = vsel %vm265, %v259, 0.0
  %v270 = vsel %vm266, %v256, 0.0
  %v271 = vsel %vm265, %v260, 0.0
  %v272 = vsel %vm266, %v257, 0.0
  %273 = vset.pattern.permute.xlu0 6
  %274 = vperm.xlu0 %273, %v17
  %v275 = vpop.permute.xlu0 %274
  %277 = vset.pattern.permute.xlu0 6
  %278 = vperm.xlu0 %277, %v18
  %v279 = vpop.permute.xlu0 %278
  %281 = vset.pattern.permute.xlu0 6
  %282 = vperm.xlu0 %281, %v19
  %v283 = vpop.permute.xlu0 %282
  %v285 = vmul.f32 %v275, %v267
  %v286 = vmul.f32 %v275, %v268
  %v287 = vmul.f32 %v279, %v269
  %v288 = vmul.f32 %v279, %v270
  %v289 = vmul.f32 %v283, %v271
  %v290 = vmul.f32 %v283, %v272
  %v291 = vadd.f32 %v188, %v285
  %v292 = vadd.f32 %v189, %v286
  %v293 = vadd.f32 %v190, %v287
  %v294 = vadd.f32 %v191, %v288
  %v295 = vadd.f32 %v192, %v289
  %v296 = vadd.f32 %v193, %v290
  %297 = vset.pattern.permute.xlu0 7
  %298 = vperm.xlu0 %297, %v17
  %v299 = vpop.permute.xlu0 %298
  %301 = vset.pattern.permute.xlu0 7
  %302 = vperm.xlu0 %301, %v18
  %v303 = vpop.permute.xlu0 %302
  %305 = vset.pattern.permute.xlu0 7
  %306 = vperm.xlu0 %305, %v19
  %v307 = vpop.permute.xlu0 %306
  %v309 = vmul.f32 %v299, %v267
  %v310 = vmul.f32 %v299, %v268
  %v311 = vmul.f32 %v303, %v269
  %v312 = vmul.f32 %v303, %v270
  %v313 = vmul.f32 %v307, %v271
  %v314 = vmul.f32 %v307, %v272
  %v315 = vadd.f32 %v212, %v309
  %v316 = vadd.f32 %v213, %v310
  %v317 = vadd.f32 %v214, %v311
  %v318 = vadd.f32 %v215, %v312
  %v319 = vadd.f32 %v216, %v313
  %v320 = vadd.f32 %v217, %v314
  %321 = vset.pattern.permute.xlu0 8
  %322 = vperm.xlu0 %321, %v17
  %v323 = vpop.permute.xlu0 %322
  %325 = vset.pattern.permute.xlu0 8
  %326 = vperm.xlu0 %325, %v18
  %v327 = vpop.permute.xlu0 %326
  %329 = vset.pattern.permute.xlu0 8
  %330 = vperm.xlu0 %329, %v19
  %v331 = vpop.permute.xlu0 %330
  %v333 = vmul.f32 %v323, %v267
  %v334 = vmul.f32 %v323, %v268
  %v335 = vmul.f32 %v327, %v269
  %v336 = vmul.f32 %v327, %v270
  %v337 = vmul.f32 %v331, %v271
  %v338 = vmul.f32 %v331, %v272
  %v339 = vadd.f32 %v236, %v333
  %v340 = vadd.f32 %v237, %v334
  %v341 = vadd.f32 %v238, %v335
  %v342 = vadd.f32 %v239, %v336
  %v343 = vadd.f32 %v240, %v337
  %v344 = vadd.f32 %v241, %v338
  %345 = vrot.lane.b32.xlu0 %v11, 1
  %v346 = vpop.permute.xlu0 %345
  %347 = vrot.lane.b32.xlu0 %v13, 1
  %v348 = vpop.permute.xlu0 %347
  %349 = vrot.lane.b32.xlu0 %v15, 1
  %v350 = vpop.permute.xlu0 %349
  %351 = vrot.lane.b32.xlu0 %v12, 1
  %v352 = vpop.permute.xlu0 %351
  %353 = vrot.lane.b32.xlu0 %v14, 1
  %v354 = vpop.permute.xlu0 %353
  %355 = vrot.lane.b32.xlu0 %v16, 1
  %v356 = vpop.permute.xlu0 %355
  %vm357 = vcmp.lt.s32.totalorder %v21, 1
  %v358 = vsel %vm357, %v346, %v352
  %v359 = vsel %vm357, %v348, %v354
  %v360 = vsel %vm357, %v350, %v356
  %v361 = vsel %vm357, %v352, %v346
  %v362 = vsel %vm357, %v354, %v348
  %v363 = vsel %vm357, %v356, %v350
  %v364 = vsel %vm31, 1, 0
  %v365 = vsel %vm32, 1, 0
  %vm366 = vcmp.eq.s32.totalorder %v364, 1
  %vm367 = vcmp.eq.s32.totalorder %v365, 1
  %v368 = vsel %vm366, %v361, 0.0
  %v369 = vsel %vm367, %v358, 0.0
  %v370 = vsel %vm366, %v362, 0.0
  %v371 = vsel %vm367, %v359, 0.0
  %v372 = vsel %vm366, %v363, 0.0
  %v373 = vsel %vm367, %v360, 0.0
  %374 = vset.pattern.permute.xlu0 9
  %375 = vperm.xlu0 %374, %v17
  %v376 = vpop.permute.xlu0 %375
  %378 = vset.pattern.permute.xlu0 9
  %379 = vperm.xlu0 %378, %v18
  %v380 = vpop.permute.xlu0 %379
  %382 = vset.pattern.permute.xlu0 9
  %383 = vperm.xlu0 %382, %v19
  %v384 = vpop.permute.xlu0 %383
  %v386 = vmul.f32 %v376, %v368
  %v387 = vmul.f32 %v376, %v369
  %v388 = vmul.f32 %v380, %v370
  %v389 = vmul.f32 %v380, %v371
  %v390 = vmul.f32 %v384, %v372
  %v391 = vmul.f32 %v384, %v373
  %v392 = vadd.f32 %v291, %v386
  %v393 = vadd.f32 %v292, %v387
  %v394 = vadd.f32 %v293, %v388
  %v395 = vadd.f32 %v294, %v389
  %v396 = vadd.f32 %v295, %v390
  %v397 = vadd.f32 %v296, %v391
  %398 = vset.pattern.permute.xlu0 10
  %399 = vperm.xlu0 %398, %v17
  %v400 = vpop.permute.xlu0 %399
  %402 = vset.pattern.permute.xlu0 10
  %403 = vperm.xlu0 %402, %v18
  %v404 = vpop.permute.xlu0 %403
  %406 = vset.pattern.permute.xlu0 10
  %407 = vperm.xlu0 %406, %v19
  %v408 = vpop.permute.xlu0 %407
  %v410 = vmul.f32 %v400, %v368
  %v411 = vmul.f32 %v400, %v369
  %v412 = vmul.f32 %v404, %v370
  %v413 = vmul.f32 %v404, %v371
  %v414 = vmul.f32 %v408, %v372
  %v415 = vmul.f32 %v408, %v373
  %v416 = vadd.f32 %v315, %v410
  %v417 = vadd.f32 %v316, %v411
  %v418 = vadd.f32 %v317, %v412
  %v419 = vadd.f32 %v318, %v413
  %v420 = vadd.f32 %v319, %v414
  %v421 = vadd.f32 %v320, %v415
  %422 = vset.pattern.permute.xlu0 11
  %423 = vperm.xlu0 %422, %v17
  %v424 = vpop.permute.xlu0 %423
  %426 = vset.pattern.permute.xlu0 11
  %427 = vperm.xlu0 %426, %v18
  %v428 = vpop.permute.xlu0 %427
  %430 = vset.pattern.permute.xlu0 11
  %431 = vperm.xlu0 %430, %v19
  %v432 = vpop.permute.xlu0 %431
  %v434 = vmul.f32 %v424, %v368
  %v435 = vmul.f32 %v424, %v369
  %v436 = vmul.f32 %v428, %v370
  %v437 = vmul.f32 %v428, %v371
  %v438 = vmul.f32 %v432, %v372
  %v439 = vmul.f32 %v432, %v373
  %v440 = vadd.f32 %v339, %v434
  %v441 = vadd.f32 %v340, %v435
  %v442 = vadd.f32 %v341, %v436
  %v443 = vadd.f32 %v342, %v437
  %v444 = vadd.f32 %v343, %v438
  %v445 = vadd.f32 %v344, %v439
  %446 = vset.pattern.permute.xlu0 12
  %447 = vperm.xlu0 %446, %v17
  %v448 = vpop.permute.xlu0 %447
  %450 = vset.pattern.permute.xlu0 12
  %451 = vperm.xlu0 %450, %v18
  %v452 = vpop.permute.xlu0 %451
  %454 = vset.pattern.permute.xlu0 12
  %455 = vperm.xlu0 %454, %v19
  %v456 = vpop.permute.xlu0 %455
  %v458 = vmul.f32 %v448, %v11
  %v459 = vmul.f32 %v448, %v12
  %v460 = vmul.f32 %v452, %v13
  %v461 = vmul.f32 %v452, %v14
  %v462 = vmul.f32 %v456, %v15
  %v463 = vmul.f32 %v456, %v16
  %v464 = vadd.f32 %v392, %v458
  %v465 = vadd.f32 %v393, %v459
  %v466 = vadd.f32 %v394, %v460
  %v467 = vadd.f32 %v395, %v461
  %v468 = vadd.f32 %v396, %v462
  %v469 = vadd.f32 %v397, %v463
  %470 = vset.pattern.permute.xlu0 13
  %471 = vperm.xlu0 %470, %v17
  %v472 = vpop.permute.xlu0 %471
  %474 = vset.pattern.permute.xlu0 13
  %475 = vperm.xlu0 %474, %v18
  %v476 = vpop.permute.xlu0 %475
  %478 = vset.pattern.permute.xlu0 13
  %479 = vperm.xlu0 %478, %v19
  %v480 = vpop.permute.xlu0 %479
  %v482 = vmul.f32 %v472, %v11
  %v483 = vmul.f32 %v472, %v12
  %v484 = vmul.f32 %v476, %v13
  %v485 = vmul.f32 %v476, %v14
  %v486 = vmul.f32 %v480, %v15
  %v487 = vmul.f32 %v480, %v16
  %v488 = vadd.f32 %v416, %v482
  %v489 = vadd.f32 %v417, %v483
  %v490 = vadd.f32 %v418, %v484
  %v491 = vadd.f32 %v419, %v485
  %v492 = vadd.f32 %v420, %v486
  %v493 = vadd.f32 %v421, %v487
  %494 = vset.pattern.permute.xlu0 14
  %495 = vperm.xlu0 %494, %v17
  %v496 = vpop.permute.xlu0 %495
  %498 = vset.pattern.permute.xlu0 14
  %499 = vperm.xlu0 %498, %v18
  %v500 = vpop.permute.xlu0 %499
  %502 = vset.pattern.permute.xlu0 14
  %503 = vperm.xlu0 %502, %v19
  %v504 = vpop.permute.xlu0 %503
  %v506 = vmul.f32 %v496, %v11
  %v507 = vmul.f32 %v496, %v12
  %v508 = vmul.f32 %v500, %v13
  %v509 = vmul.f32 %v500, %v14
  %v510 = vmul.f32 %v504, %v15
  %v511 = vmul.f32 %v504, %v16
  %v512 = vadd.f32 %v440, %v506
  %v513 = vadd.f32 %v441, %v507
  %v514 = vadd.f32 %v442, %v508
  %v515 = vadd.f32 %v443, %v509
  %v516 = vadd.f32 %v444, %v510
  %v517 = vadd.f32 %v445, %v511
  %518 = vrot.lane.b32.xlu0 %v11, 127
  %v519 = vpop.permute.xlu0 %518
  %520 = vrot.lane.b32.xlu0 %v13, 127
  %v521 = vpop.permute.xlu0 %520
  %522 = vrot.lane.b32.xlu0 %v15, 127
  %v523 = vpop.permute.xlu0 %522
  %524 = vrot.lane.b32.xlu0 %v12, 127
  %v525 = vpop.permute.xlu0 %524
  %526 = vrot.lane.b32.xlu0 %v14, 127
  %v527 = vpop.permute.xlu0 %526
  %528 = vrot.lane.b32.xlu0 %v16, 127
  %v529 = vpop.permute.xlu0 %528
  %vm530 = vcmp.lt.s32.totalorder %v21, 127
  %v531 = vsel %vm530, %v519, %v525
  %v532 = vsel %vm530, %v521, %v527
  %v533 = vsel %vm530, %v523, %v529
  %v534 = vsel %vm530, %v525, %v519
  %v535 = vsel %vm530, %v527, %v521
  %v536 = vsel %vm530, %v529, %v523
  %v537 = vsel %vm33, 1, 0
  %v538 = vsel %vm34, 1, 0
  %vm539 = vcmp.eq.s32.totalorder %v537, 1
  %vm540 = vcmp.eq.s32.totalorder %v538, 1
  %v541 = vsel %vm539, %v531, 0.0
  %v542 = vsel %vm540, %v534, 0.0
  %v543 = vsel %vm539, %v532, 0.0
  %v544 = vsel %vm540, %v535, 0.0
  %v545 = vsel %vm539, %v533, 0.0
  %v546 = vsel %vm540, %v536, 0.0
  %547 = vset.pattern.permute.xlu0 15
  %548 = vperm.xlu0 %547, %v17
  %v549 = vpop.permute.xlu0 %548
  %551 = vset.pattern.permute.xlu0 15
  %552 = vperm.xlu0 %551, %v18
  %v553 = vpop.permute.xlu0 %552
  %555 = vset.pattern.permute.xlu0 15
  %556 = vperm.xlu0 %555, %v19
  %v557 = vpop.permute.xlu0 %556
  %v559 = vmul.f32 %v549, %v541
  %v560 = vmul.f32 %v549, %v542
  %v561 = vmul.f32 %v553, %v543
  %v562 = vmul.f32 %v553, %v544
  %v563 = vmul.f32 %v557, %v545
  %v564 = vmul.f32 %v557, %v546
  %v565 = vadd.f32 %v464, %v559
  %v566 = vadd.f32 %v465, %v560
  %v567 = vadd.f32 %v466, %v561
  %v568 = vadd.f32 %v467, %v562
  %v569 = vadd.f32 %v468, %v563
  %v570 = vadd.f32 %v469, %v564
  %571 = vset.pattern.permute.xlu0 16
  %572 = vperm.xlu0 %571, %v17
  %v573 = vpop.permute.xlu0 %572
  %575 = vset.pattern.permute.xlu0 16
  %576 = vperm.xlu0 %575, %v18
  %v577 = vpop.permute.xlu0 %576
  %579 = vset.pattern.permute.xlu0 16
  %580 = vperm.xlu0 %579, %v19
  %v581 = vpop.permute.xlu0 %580
  %v583 = vmul.f32 %v573, %v541
  %v584 = vmul.f32 %v573, %v542
  %v585 = vmul.f32 %v577, %v543
  %v586 = vmul.f32 %v577, %v544
  %v587 = vmul.f32 %v581, %v545
  %v588 = vmul.f32 %v581, %v546
  %v589 = vadd.f32 %v488, %v583
  %v590 = vadd.f32 %v489, %v584
  %v591 = vadd.f32 %v490, %v585
  %v592 = vadd.f32 %v491, %v586
  %v593 = vadd.f32 %v492, %v587
  %v594 = vadd.f32 %v493, %v588
  %595 = vset.pattern.permute.xlu0 17
  %596 = vperm.xlu0 %595, %v17
  %v597 = vpop.permute.xlu0 %596
  %599 = vset.pattern.permute.xlu0 17
  %600 = vperm.xlu0 %599, %v18
  %v601 = vpop.permute.xlu0 %600
  %603 = vset.pattern.permute.xlu0 17
  %604 = vperm.xlu0 %603, %v19
  %v605 = vpop.permute.xlu0 %604
  %v607 = vmul.f32 %v597, %v541
  %v608 = vmul.f32 %v597, %v542
  %v609 = vmul.f32 %v601, %v543
  %v610 = vmul.f32 %v601, %v544
  %v611 = vmul.f32 %v605, %v545
  %v612 = vmul.f32 %v605, %v546
  %v613 = vadd.f32 %v512, %v607
  %v614 = vadd.f32 %v513, %v608
  %v615 = vadd.f32 %v514, %v609
  %v616 = vadd.f32 %v515, %v610
  %v617 = vadd.f32 %v516, %v611
  %v618 = vadd.f32 %v517, %v612
  %619 = vrot.lane.b32.xlu0 %v11, 113
  %v620 = vpop.permute.xlu0 %619
  %621 = vrot.lane.b32.xlu0 %v13, 113
  %v622 = vpop.permute.xlu0 %621
  %623 = vrot.lane.b32.xlu0 %v15, 113
  %v624 = vpop.permute.xlu0 %623
  %625 = vrot.lane.b32.xlu0 %v12, 113
  %v626 = vpop.permute.xlu0 %625
  %627 = vrot.lane.b32.xlu0 %v14, 113
  %v628 = vpop.permute.xlu0 %627
  %629 = vrot.lane.b32.xlu0 %v16, 113
  %v630 = vpop.permute.xlu0 %629
  %vm631 = vcmp.lt.s32.totalorder %v21, 113
  %v632 = vsel %vm631, %v620, %v626
  %v633 = vsel %vm631, %v622, %v628
  %v634 = vsel %vm631, %v624, %v630
  %v635 = vsel %vm631, %v626, %v620
  %v636 = vsel %vm631, %v628, %v622
  %v637 = vsel %vm631, %v630, %v624
  %vm638 = vmand %vm29, %vm31
  %vm639 = vmand %vm30, %vm32
  %v640 = vsel %vm638, 1, 0
  %v641 = vsel %vm639, 1, 0
  %vm642 = vcmp.eq.s32.totalorder %v640, 1
  %vm643 = vcmp.eq.s32.totalorder %v641, 1
  %v644 = vsel %vm642, %v632, 0.0
  %v645 = vsel %vm643, %v635, 0.0
  %v646 = vsel %vm642, %v633, 0.0
  %v647 = vsel %vm643, %v636, 0.0
  %v648 = vsel %vm642, %v634, 0.0
  %v649 = vsel %vm643, %v637, 0.0
  %650 = vset.pattern.permute.xlu0 18
  %651 = vperm.xlu0 %650, %v17
  %v652 = vpop.permute.xlu0 %651
  %654 = vset.pattern.permute.xlu0 18
  %655 = vperm.xlu0 %654, %v18
  %v656 = vpop.permute.xlu0 %655
  %658 = vset.pattern.permute.xlu0 18
  %659 = vperm.xlu0 %658, %v19
  %v660 = vpop.permute.xlu0 %659
  %v662 = vmul.f32 %v652, %v644
  %v663 = vmul.f32 %v652, %v645
  %v664 = vmul.f32 %v656, %v646
  %v665 = vmul.f32 %v656, %v647
  %v666 = vmul.f32 %v660, %v648
  %v667 = vmul.f32 %v660, %v649
  %v668 = vadd.f32 %v565, %v662
  %v669 = vadd.f32 %v566, %v663
  %v670 = vadd.f32 %v567, %v664
  %v671 = vadd.f32 %v568, %v665
  %v672 = vadd.f32 %v569, %v666
  %v673 = vadd.f32 %v570, %v667
  %674 = vset.pattern.permute.xlu0 19
  %675 = vperm.xlu0 %674, %v17
  %v676 = vpop.permute.xlu0 %675
  %678 = vset.pattern.permute.xlu0 19
  %679 = vperm.xlu0 %678, %v18
  %v680 = vpop.permute.xlu0 %679
  %682 = vset.pattern.permute.xlu0 19
  %683 = vperm.xlu0 %682, %v19
  %v684 = vpop.permute.xlu0 %683
  %v686 = vmul.f32 %v676, %v644
  %v687 = vmul.f32 %v676, %v645
  %v688 = vmul.f32 %v680, %v646
  %v689 = vmul.f32 %v680, %v647
  %v690 = vmul.f32 %v684, %v648
  %v691 = vmul.f32 %v684, %v649
  %v692 = vadd.f32 %v589, %v686
  %v693 = vadd.f32 %v590, %v687
  %v694 = vadd.f32 %v591, %v688
  %v695 = vadd.f32 %v592, %v689
  %v696 = vadd.f32 %v593, %v690
  %v697 = vadd.f32 %v594, %v691
  %698 = vset.pattern.permute.xlu0 20
  %699 = vperm.xlu0 %698, %v17
  %v700 = vpop.permute.xlu0 %699
  %702 = vset.pattern.permute.xlu0 20
  %703 = vperm.xlu0 %702, %v18
  %v704 = vpop.permute.xlu0 %703
  %706 = vset.pattern.permute.xlu0 20
  %707 = vperm.xlu0 %706, %v19
  %v708 = vpop.permute.xlu0 %707
  %v710 = vmul.f32 %v700, %v644
  %v711 = vmul.f32 %v700, %v645
  %v712 = vmul.f32 %v704, %v646
  %v713 = vmul.f32 %v704, %v647
  %v714 = vmul.f32 %v708, %v648
  %v715 = vmul.f32 %v708, %v649
  %v716 = vadd.f32 %v613, %v710
  %v717 = vadd.f32 %v614, %v711
  %v718 = vadd.f32 %v615, %v712
  %v719 = vadd.f32 %v616, %v713
  %v720 = vadd.f32 %v617, %v714
  %v721 = vadd.f32 %v618, %v715
  %722 = vrot.lane.b32.xlu0 %v11, 112
  %v723 = vpop.permute.xlu0 %722
  %724 = vrot.lane.b32.xlu0 %v13, 112
  %v725 = vpop.permute.xlu0 %724
  %726 = vrot.lane.b32.xlu0 %v15, 112
  %v727 = vpop.permute.xlu0 %726
  %728 = vrot.lane.b32.xlu0 %v12, 112
  %v729 = vpop.permute.xlu0 %728
  %730 = vrot.lane.b32.xlu0 %v14, 112
  %v731 = vpop.permute.xlu0 %730
  %732 = vrot.lane.b32.xlu0 %v16, 112
  %v733 = vpop.permute.xlu0 %732
  %vm734 = vcmp.lt.s32.totalorder %v21, 112
  %v735 = vsel %vm734, %v723, %v729
  %v736 = vsel %vm734, %v725, %v731
  %v737 = vsel %vm734, %v727, %v733
  %v738 = vsel %vm734, %v729, %v723
  %v739 = vsel %vm734, %v731, %v725
  %v740 = vsel %vm734, %v733, %v727
  %v741 = vsel %vm29, 1, 0
  %v742 = vsel %vm30, 1, 0
  %vm743 = vcmp.eq.s32.totalorder %v741, 1
  %vm744 = vcmp.eq.s32.totalorder %v742, 1
  %v745 = vsel %vm743, %v735, 0.0
  %v746 = vsel %vm744, %v738, 0.0
  %v747 = vsel %vm743, %v736, 0.0
  %v748 = vsel %vm744, %v739, 0.0
  %v749 = vsel %vm743, %v737, 0.0
  %v750 = vsel %vm744, %v740, 0.0
  %751 = vset.pattern.permute.xlu0 21
  %752 = vperm.xlu0 %751, %v17
  %v753 = vpop.permute.xlu0 %752
  %755 = vset.pattern.permute.xlu0 21
  %756 = vperm.xlu0 %755, %v18
  %v757 = vpop.permute.xlu0 %756
  %759 = vset.pattern.permute.xlu0 21
  %760 = vperm.xlu0 %759, %v19
  %v761 = vpop.permute.xlu0 %760
  %v763 = vmul.f32 %v753, %v745
  %v764 = vmul.f32 %v753, %v746
  %v765 = vmul.f32 %v757, %v747
  %v766 = vmul.f32 %v757, %v748
  %v767 = vmul.f32 %v761, %v749
  %v768 = vmul.f32 %v761, %v750
  %v769 = vadd.f32 %v668, %v763
  %v770 = vadd.f32 %v669, %v764
  %v771 = vadd.f32 %v670, %v765
  %v772 = vadd.f32 %v671, %v766
  %v773 = vadd.f32 %v672, %v767
  %v774 = vadd.f32 %v673, %v768
  %775 = vset.pattern.permute.xlu0 22
  %776 = vperm.xlu0 %775, %v17
  %v777 = vpop.permute.xlu0 %776
  %779 = vset.pattern.permute.xlu0 22
  %780 = vperm.xlu0 %779, %v18
  %v781 = vpop.permute.xlu0 %780
  %783 = vset.pattern.permute.xlu0 22
  %784 = vperm.xlu0 %783, %v19
  %v785 = vpop.permute.xlu0 %784
  %v787 = vmul.f32 %v777, %v745
  %v788 = vmul.f32 %v777, %v746
  %v789 = vmul.f32 %v781, %v747
  %v790 = vmul.f32 %v781, %v748
  %v791 = vmul.f32 %v785, %v749
  %v792 = vmul.f32 %v785, %v750
  %v793 = vadd.f32 %v692, %v787
  %v794 = vadd.f32 %v693, %v788
  %v795 = vadd.f32 %v694, %v789
  %v796 = vadd.f32 %v695, %v790
  %v797 = vadd.f32 %v696, %v791
  %v798 = vadd.f32 %v697, %v792
  %799 = vset.pattern.permute.xlu0 23
  %800 = vperm.xlu0 %799, %v17
  %v801 = vpop.permute.xlu0 %800
  %803 = vset.pattern.permute.xlu0 23
  %804 = vperm.xlu0 %803, %v18
  %v805 = vpop.permute.xlu0 %804
  %807 = vset.pattern.permute.xlu0 23
  %808 = vperm.xlu0 %807, %v19
  %v809 = vpop.permute.xlu0 %808
  %v811 = vmul.f32 %v801, %v745
  %v812 = vmul.f32 %v801, %v746
  %v813 = vmul.f32 %v805, %v747
  %v814 = vmul.f32 %v805, %v748
  %v815 = vmul.f32 %v809, %v749
  %v816 = vmul.f32 %v809, %v750
  %v817 = vadd.f32 %v716, %v811
  %v818 = vadd.f32 %v717, %v812
  %v819 = vadd.f32 %v718, %v813
  %v820 = vadd.f32 %v719, %v814
  %v821 = vadd.f32 %v720, %v815
  %v822 = vadd.f32 %v721, %v816
  %823 = vrot.lane.b32.xlu0 %v11, 111
  %v824 = vpop.permute.xlu0 %823
  %825 = vrot.lane.b32.xlu0 %v13, 111
  %v826 = vpop.permute.xlu0 %825
  %827 = vrot.lane.b32.xlu0 %v15, 111
  %v828 = vpop.permute.xlu0 %827
  %829 = vrot.lane.b32.xlu0 %v12, 111
  %v830 = vpop.permute.xlu0 %829
  %831 = vrot.lane.b32.xlu0 %v14, 111
  %v832 = vpop.permute.xlu0 %831
  %833 = vrot.lane.b32.xlu0 %v16, 111
  %v834 = vpop.permute.xlu0 %833
  %vm835 = vcmp.lt.s32.totalorder %v21, 111
  %v836 = vsel %vm835, %v824, %v830
  %v837 = vsel %vm835, %v826, %v832
  %v838 = vsel %vm835, %v828, %v834
  %v839 = vsel %vm835, %v830, %v824
  %v840 = vsel %vm835, %v832, %v826
  %v841 = vsel %vm835, %v834, %v828
  %vm842 = vmand %vm29, %vm33
  %vm843 = vmand %vm30, %vm34
  %v844 = vsel %vm842, 1, 0
  %v845 = vsel %vm843, 1, 0
  %vm846 = vcmp.eq.s32.totalorder %v844, 1
  %vm847 = vcmp.eq.s32.totalorder %v845, 1
  %v848 = vsel %vm846, %v836, 0.0
  %v849 = vsel %vm847, %v839, 0.0
  %v850 = vsel %vm846, %v837, 0.0
  %v851 = vsel %vm847, %v840, 0.0
  %v852 = vsel %vm846, %v838, 0.0
  %v853 = vsel %vm847, %v841, 0.0
  %854 = vset.pattern.permute.xlu0 24
  %855 = vperm.xlu0 %854, %v17
  %v856 = vpop.permute.xlu0 %855
  %858 = vset.pattern.permute.xlu0 24
  %859 = vperm.xlu0 %858, %v18
  %v860 = vpop.permute.xlu0 %859
  %862 = vset.pattern.permute.xlu0 24
  %863 = vperm.xlu0 %862, %v19
  %v864 = vpop.permute.xlu0 %863
  %v866 = vmul.f32 %v856, %v848
  %v867 = vmul.f32 %v856, %v849
  %v868 = vmul.f32 %v860, %v850
  %v869 = vmul.f32 %v860, %v851
  %v870 = vmul.f32 %v864, %v852
  %v871 = vmul.f32 %v864, %v853
  %v872 = vadd.f32 %v769, %v866
  %v873 = vadd.f32 %v770, %v867
  %v874 = vadd.f32 %v771, %v868
  %v875 = vadd.f32 %v772, %v869
  %v876 = vadd.f32 %v773, %v870
  %v877 = vadd.f32 %v774, %v871
  %878 = vset.pattern.permute.xlu0 25
  %879 = vperm.xlu0 %878, %v17
  %v880 = vpop.permute.xlu0 %879
  %882 = vset.pattern.permute.xlu0 25
  %883 = vperm.xlu0 %882, %v18
  %v884 = vpop.permute.xlu0 %883
  %886 = vset.pattern.permute.xlu0 25
  %887 = vperm.xlu0 %886, %v19
  %v888 = vpop.permute.xlu0 %887
  %v890 = vmul.f32 %v880, %v848
  %v891 = vmul.f32 %v880, %v849
  %v892 = vmul.f32 %v884, %v850
  %v893 = vmul.f32 %v884, %v851
  %v894 = vmul.f32 %v888, %v852
  %v895 = vmul.f32 %v888, %v853
  %v896 = vadd.f32 %v793, %v890
  %v897 = vadd.f32 %v794, %v891
  %v898 = vadd.f32 %v795, %v892
  %v899 = vadd.f32 %v796, %v893
  %v900 = vadd.f32 %v797, %v894
  %v901 = vadd.f32 %v798, %v895
  %902 = vset.pattern.permute.xlu0 26
  %903 = vperm.xlu0 %902, %v17
  %v904 = vpop.permute.xlu0 %903
  %906 = vset.pattern.permute.xlu0 26
  %907 = vperm.xlu0 %906, %v18
  %v908 = vpop.permute.xlu0 %907
  %910 = vset.pattern.permute.xlu0 26
  %911 = vperm.xlu0 %910, %v19
  %v912 = vpop.permute.xlu0 %911
  %v914 = vmul.f32 %v904, %v848
  %v915 = vmul.f32 %v904, %v849
  %v916 = vmul.f32 %v908, %v850
  %v917 = vmul.f32 %v908, %v851
  %v918 = vmul.f32 %v912, %v852
  %v919 = vmul.f32 %v912, %v853
  %v920 = vadd.f32 %v817, %v914
  %v921 = vadd.f32 %v818, %v915
  %v922 = vadd.f32 %v819, %v916
  %v923 = vadd.f32 %v820, %v917
  %v924 = vadd.f32 %v821, %v918
  %v925 = vadd.f32 %v822, %v919
  %vm930 = vcmask 1041408
  %v931 = vrot.slane %v872, 6
  %v932 = vrot.slane %v874, 6
  %v933 = vsel %vm930, %v931, %v932
  %v934 = vrot.slane %v873, 6
  %v935 = vrot.slane %v875, 6
  %v936 = vsel %vm930, %v934, %v935
  %v939 = vadd.f32 %v872, %v933
  %v940 = vadd.f32 %v873, %v936
  %vm943 = vcmask 1043456
  %v944 = vrot.slane %v874, 4
  %v945 = vrot.slane %v876, 4
  %v946 = vsel %vm943, %v944, %v945
  %v947 = vrot.slane %v875, 4
  %v948 = vrot.slane %v877, 4
  %v949 = vsel %vm943, %v947, %v948
  %v952 = vadd.f32 %v939, %v946
  %v953 = vadd.f32 %v940, %v949
  %v954 = vrot.slane %v876, 2
  %v955 = vrot.slane %v877, 2
  %v958 = vadd.f32 %v952, %v954
  %v959 = vadd.f32 %v953, %v955
  %960 = vst [vmem:[%s2] sm:$0x3f] %v958
  %961 = vst [vmem:[%s2 + $0x8] sm:$0x3f] %v959
  %v966 = vrot.slane %v896, 6
  %v967 = vrot.slane %v898, 6
  %v968 = vsel %vm930, %v966, %v967
  %v969 = vrot.slane %v897, 6
  %v970 = vrot.slane %v899, 6
  %v971 = vsel %vm930, %v969, %v970
  %v974 = vadd.f32 %v896, %v968
  %v975 = vadd.f32 %v897, %v971
  %v978 = vrot.slane %v898, 4
  %v979 = vrot.slane %v900, 4
  %v980 = vsel %vm943, %v978, %v979
  %v981 = vrot.slane %v899, 4
  %v982 = vrot.slane %v901, 4
  %v983 = vsel %vm943, %v981, %v982
  %v986 = vadd.f32 %v974, %v980
  %v987 = vadd.f32 %v975, %v983
  %v988 = vrot.slane %v900, 2
  %v989 = vrot.slane %v901, 2
  %v992 = vadd.f32 %v986, %v988
  %v993 = vadd.f32 %v987, %v989
  %s994 = scalar_lea.vmem %s2, 16
  %995 = vst [vmem:[%s994] sm:$0x3f] %v992
  %996 = vst [vmem:[%s994 + $0x8] sm:$0x3f] %v993
  %v1001 = vrot.slane %v920, 6
  %v1002 = vrot.slane %v922, 6
  %v1003 = vsel %vm930, %v1001, %v1002
  %v1004 = vrot.slane %v921, 6
  %v1005 = vrot.slane %v923, 6
  %v1006 = vsel %vm930, %v1004, %v1005
  %v1009 = vadd.f32 %v920, %v1003
  %v1010 = vadd.f32 %v921, %v1006
  %v1013 = vrot.slane %v922, 4
  %v1014 = vrot.slane %v924, 4
  %v1015 = vsel %vm943, %v1013, %v1014
  %v1016 = vrot.slane %v923, 4
  %v1017 = vrot.slane %v925, 4
  %v1018 = vsel %vm943, %v1016, %v1017
  %v1021 = vadd.f32 %v1009, %v1015
  %v1022 = vadd.f32 %v1010, %v1018
  %v1023 = vrot.slane %v924, 2
  %v1024 = vrot.slane %v925, 2
  %v1027 = vadd.f32 %v1021, %v1023
  %v1028 = vadd.f32 %v1022, %v1024
  %s1029 = scalar_lea.vmem %s2, 32
  %1030 = vst [vmem:[%s1029] sm:$0x3f] %v1027
  %1031 = vst [vmem:[%s1029 + $0x8] sm:$0x3f] %v1028
  // Predicated region
  $region10: #{tri_recon_pallas.1} parent=0 // pred_check
    _
  $region11: #{tri_recon_pallas.1} parent=0 // pred_check_branch
    %1033 = sbr.rel (0) target = $region13
  $region12: #{tri_recon_pallas.1} parent=0 // pred_region
    _
  $region13: #{tri_recon_pallas.1} parent=0 // pred_fallthru
    _
  // Predicated region
  $region14: #{tri_recon_pallas.1} parent=0 // pred_check
    _
  $region15: #{tri_recon_pallas.1} parent=0 // pred_check_branch
    %1035 = sbr.rel (0) target = $region17
  $region16: #{tri_recon_pallas.1} parent=0 // pred_region
    _
  $region17: #{tri_recon_pallas.1} parent=0 // pred_fallthru
    _

</llo_original>
